<compile_context>
chip_gen: v5e
topology: v5e:2x2
jax: 0.10.0
libtpu: 0.0.40
codegen_flags: <defaults>
</compile_context>

<pallas_src>
import functools

import jax
import jax.numpy as jnp
from jax.experimental import pallas as pl
from jax.experimental.pallas import tpu as pltpu


def _cnn_kernel(x_ref, w0_ref, w1_ref, b_ref, o_ref, *, batch, length):
    # x_ref : (B*L, C)  activations, batch collapsed into the sublane dim.
    # w0_ref/w1_ref : (C, C) conv taps, pre-transposed to (C_in, C_out).
    # b_ref : (1, C) bias.   o_ref : (B, C) output.
    x = x_ref[...]

    # One contraction per tap over the full collapsed M = B*L (the few rows
    # computed at window edges are simply never read below).
    s0 = jnp.dot(x, w0_ref[...], preferred_element_type=jnp.float32)   # (M, C)
    s1 = jnp.dot(x, w1_ref[...], preferred_element_type=jnp.float32)   # (M, C)

    # Conv output at flat row r = b*L + t (valid for t < L-1):  s0[r] + s1[r+1].
    # Sublane-shifted slice of the f32 accumulator; no lane concat needed.
    a = s0[:-1, :] + s1[1:, :]                                          # (M-1, C)

    # MaxPool over time, per window.  `batch` is static and small -> unrolled.
    # Each window's slice starts at a multiple of L (sublane-aligned for
    # L % 8 == 0) and the cross-window garbage rows are never touched.
    rows = []
    for b in range(batch):
        start = b * length
        rows.append(jnp.max(a[start:start + length - 1, :], axis=0, keepdims=True))
    m = jnp.concatenate(rows, axis=0)                                   # (B, C)

    # Bias + ReLU hoisted past the max (bias uniform over t, ReLU monotone):
    #   max_t relu(s_t + b) == relu(max_t(s_t) + b)
    o_ref[...] = jnp.maximum(m + b_ref[...], 0.0)


def prepare_cnn_params(w, b):
    """One-time (model-init-time) weight prep — keep OFF the per-call hot path.

    w: (C_out, C_in, 2) float32  -- PyTorch Conv1d weight layout.
    b: (C_out,) float32
    Returns (w0, w1, b2): w0/w1 (C_in, C_out), b2 (1, C_out).
    """
    w0 = jnp.transpose(w[:, :, 0])
    w1 = jnp.transpose(w[:, :, 1])
    b2 = b.reshape(1, -1)
    return w0, w1, b2


def cnn_pallas(x, w0, w1, b2):
    """Forward pass. x: (B, L, C) float32; (w0, w1, b2) from prepare_cnn_params."""
    # Degenerate paths, mirroring the PyTorch forward exactly (pure glue).
    if min(x.shape) <= 1:
        if min(x.shape) == 0:
            return jnp.zeros((1, x.shape[-1]), dtype=jnp.float32)
        # torch.squeeze(x, 0) only squeezes if dim 0 has size 1; then max over dim 0.
        xs = jnp.squeeze(x, axis=0) if x.shape[0] == 1 else x
        return jnp.max(xs, axis=0)

    B, L, C = x.shape
    x2 = x.reshape(B * L, C)  # free metadata reshape: collapse batch into M

    kernel = functools.partial(_cnn_kernel, batch=B, length=L)
    vmem = pl.BlockSpec(memory_space=pltpu.MemorySpace.VMEM)
    return pl.pallas_call(
        kernel,
        out_shape=jax.ShapeDtypeStruct((B, C), jnp.float32),
        in_specs=[vmem, vmem, vmem, vmem],
        out_specs=vmem,
    )(x2, w0, w1, b2)


def cnn_reference(x, w, b):
    """Pure-JAX reference of the PyTorch main path for a correctness check."""
    x0 = x[:, :-1, :]
    x1 = x[:, 1:, :]
    s = (jnp.einsum('blc,oc->blo', x0, w[:, :, 0])
         + jnp.einsum('blc,oc->blo', x1, w[:, :, 1])
         + b[None, None, :])
    s = jnp.maximum(s, 0.0)
    return jnp.max(s, axis=1)


if __name__ == "__main__":
    # Small shapes consistent with the module: batch=2, sub_len=16, in_dim=32.
    B, SUB_LEN, IN_DIM = 2, 16, 32

    key = jax.random.PRNGKey(0)
    kx, kw, kb = jax.random.split(key, 3)

    x = jax.random.normal(kx, (B, SUB_LEN, IN_DIM), dtype=jnp.float32)

    # Deterministic Conv1d-style init: U(-bound, bound), bound = 1/sqrt(in_dim * k)
    fan_in = IN_DIM * 2
    bound = 1.0 / jnp.sqrt(jnp.float32(fan_in))
    w = jax.random.uniform(kw, (IN_DIM, IN_DIM, 2), dtype=jnp.float32,
                           minval=-bound, maxval=bound)
    b = jax.random.uniform(kb, (IN_DIM,), dtype=jnp.float32,
                           minval=-bound, maxval=bound)

    # Init-time prep (hoisted out of the per-call hot path, per the perf review).
    w0, w1, b2 = prepare_cnn_params(w, b)

    out = jax.block_until_ready(cnn_pallas(x, w0, w1, b2))

    ref = cnn_reference(x, w, b)
    assert out.shape == (B, IN_DIM)
    assert jnp.allclose(out, ref, atol=1e-5, rtol=1e-5)

    print("KERNEL_OK")
</pallas_src>

<mosaic_0001>
module attributes {stable_mosaic.version = 11 : i64} {
  func.func @_cnn_kernel(%arg0: memref<32x32xf32, #tpu.memory_space<vmem>>, %arg1: memref<32x32xf32, #tpu.memory_space<vmem>>, %arg2: memref<32x32xf32, #tpu.memory_space<vmem>>, %arg3: memref<1x32xf32, #tpu.memory_space<vmem>>, %arg4: memref<2x32xf32, #tpu.memory_space<vmem>>) attributes {dimension_semantics = [], scalar_prefetch = 0 : i64, scratch_operands = 0 : i64, tpu.core_type = #tpu.core_type<tc>} {
    %c0 = arith.constant 0 : index
    %c0_0 = arith.constant 0 : index
    %0 = vector.load %arg0[%c0, %c0_0] : memref<32x32xf32, #tpu.memory_space<vmem>>, vector<32x32xf32>
    %c0_1 = arith.constant 0 : index
    %c0_2 = arith.constant 0 : index
    %1 = vector.load %arg1[%c0_1, %c0_2] : memref<32x32xf32, #tpu.memory_space<vmem>>, vector<32x32xf32>
    %cst = arith.constant dense<0.000000e+00> : vector<32x32xf32>
    %2 = tpu.matmul %0, %1, %cst {dimension_numbers = #tpu.dot_dimension_numbers<[1], [0], [0], [1], [0, 0, 1, 1], [], []>} : vector<32x32xf32>, vector<32x32xf32>, vector<32x32xf32> -> vector<32x32xf32>
    %c0_3 = arith.constant 0 : index
    %c0_4 = arith.constant 0 : index
    %3 = vector.load %arg2[%c0_3, %c0_4] : memref<32x32xf32, #tpu.memory_space<vmem>>, vector<32x32xf32>
    %cst_5 = arith.constant dense<0.000000e+00> : vector<32x32xf32>
    %4 = tpu.matmul %0, %3, %cst_5 {dimension_numbers = #tpu.dot_dimension_numbers<[1], [0], [0], [1], [0, 0, 1, 1], [], []>} : vector<32x32xf32>, vector<32x32xf32>, vector<32x32xf32> -> vector<32x32xf32>
    %5 = vector.extract_strided_slice %2 {offsets = [0, 0], sizes = [31, 32], strides = [1, 1]} : vector<32x32xf32> to vector<31x32xf32>
    %6 = vector.extract_strided_slice %4 {offsets = [1, 0], sizes = [31, 32], strides = [1, 1]} : vector<32x32xf32> to vector<31x32xf32>
    %7 = arith.addf %5, %6 : vector<31x32xf32>
    %8 = vector.extract_strided_slice %7 {offsets = [0, 0], sizes = [15, 32], strides = [1, 1]} : vector<31x32xf32> to vector<15x32xf32>
    %cst_6 = arith.constant dense<0xFF800000> : vector<32xf32>
    %9 = vector.multi_reduction <maximumf>, %8, %cst_6 [0] : vector<15x32xf32> to vector<32xf32>
    %10 = vector.shape_cast %9 : vector<32xf32> to vector<1x32xf32>
    %11 = vector.extract_strided_slice %7 {offsets = [16, 0], sizes = [15, 32], strides = [1, 1]} : vector<31x32xf32> to vector<15x32xf32>
    %cst_7 = arith.constant dense<0xFF800000> : vector<32xf32>
    %12 = vector.multi_reduction <maximumf>, %11, %cst_7 [0] : vector<15x32xf32> to vector<32xf32>
    %13 = vector.shape_cast %12 : vector<32xf32> to vector<1x32xf32>
    %14 = tpu.concatenate %10, %13 in 0 : vector<1x32xf32>, vector<1x32xf32> -> vector<2x32xf32>
    %c0_8 = arith.constant 0 : index
    %c0_9 = arith.constant 0 : index
    %15 = vector.load %arg3[%c0_8, %c0_9] : memref<1x32xf32, #tpu.memory_space<vmem>>, vector<1x32xf32>
    %16 = vector.broadcast %15 : vector<1x32xf32> to vector<2x32xf32>
    %17 = arith.addf %14, %16 : vector<2x32xf32>
    %cst_10 = arith.constant 0.000000e+00 : f32
    %18 = vector.broadcast %cst_10 : f32 to vector<2x32xf32>
    %19 = arith.maximumf %17, %18 : vector<2x32xf32>
    %c0_11 = arith.constant 0 : index
    %c0_12 = arith.constant 0 : index
    %20 = vector.load %arg4[%c0_11, %c0_12] : memref<2x32xf32, #tpu.memory_space<vmem>>, vector<2x32xf32>
    tpu.vector_store %arg4[%c0_11, %c0_12], %19 {strides = array<i32>} : memref<2x32xf32, #tpu.memory_space<vmem>>, vector<2x32xf32>,
    return
  }
}

</mosaic_0001>

<llo_original>
// kernel: tpu_custom_call.1
$region0: #{tpu_custom_call.1}
  #allocation0 [shape = 'u32[]', space=smem, size = 0x4, offset = 0x4, fixed_abs, tag = 'smem constant byte address 0x4 - core index']
  #allocation1 [shape = 'u32[72,128]{1,0:T(1,128)}', space=vmem, size = 0x9000, scoped, tag = 'internal scratch']
  %s0 = inlined_call_operand.hbm [shape: f32[32,32], index: 0, kind: input, shape index: {}]
  %s1 = inlined_call_operand.hbm [shape: f32[32,32], index: 1, kind: input, shape index: {}]
  %s2 = inlined_call_operand.hbm [shape: f32[32,32], index: 2, kind: input, shape index: {}]
  %s3 = inlined_call_operand.vmem [shape: f32[1,32], index: 3, kind: input, shape index: {}]
  %s4 = inlined_call_operand.hbm [shape: f32[2,32], index: 4, kind: output, shape index: {}]
  %s5 = sld [smem:[#allocation0]]
  $region38: #{tpu_custom_call.1} parent=0
    _
  %s7 = ssub.s32 1, %s5
  %s8 = scalar_select 0, %s7, %s5
  $region1: #{tpu_custom_call.1} parent=0
    #allocation2 [shape = 'u8[16384]{0}', space=vmem, size = 0x4000, scoped, tag = 'input window, operand 0, single buffered']
    #allocation3 [shape = 's32[1]{0}', space=sflag, size = 0x4, scoped, tag = 'scoped memory for tpu_custom_call.1']
    #allocation4 [shape = 's32[1]{0}', space=sflag, size = 0x4, scoped, tag = 'scoped memory for tpu_custom_call.1']
    #allocation5 [shape = 'u8[16384]{0}', space=vmem, size = 0x4000, scoped, tag = 'input window, operand 1, single buffered']
    #allocation6 [shape = 's32[1]{0}', space=sflag, size = 0x4, scoped, tag = 'scoped memory for tpu_custom_call.1']
    #allocation7 [shape = 'u8[16384]{0}', space=vmem, size = 0x4000, scoped, tag = 'input window, operand 2, single buffered']
    #allocation8 [shape = 'u8[1024]{0}', space=vmem, size = 0x400, scoped, tag = 'output window, operand 0, single buffered']
    %9 = vsyncpa [#allocation3], 0
    %10 = vsyncpa [#allocation6], 0
    %11 = vsyncpa [#allocation4], 0
    // Predicated region
    $region2: #{tpu_custom_call.1} parent=1 // pred_check
      _
    $region3: #{tpu_custom_call.1} parent=1 // pred_check_branch
      %13 = sbr.rel (0) target = $region5
    $region4: #{tpu_custom_call.1} parent=1 // pred_region
      %15 = vsyncadd [#allocation3], 0
      %s16 = sshll.u32 %s0, 4
      %s17 = int_to_ptr.hbm [resolvable:$true] %s16
      %s18 = sshll.u32 [#allocation2], 4
      %s19 = int_to_ptr.vmem [resolvable:$true] %s18
      %24 = dma.hbm_to_vmem [thread:$0]  %s17, 512, %s19, [#allocation3], 128, 128, 8
    $region5: #{tpu_custom_call.1} parent=1 // pred_fallthru
      _
    // Predicated region
    $region6: #{tpu_custom_call.1} parent=1 // pred_check
      _
    $region7: #{tpu_custom_call.1} parent=1 // pred_check_branch
      %26 = sbr.rel (0) target = $region9
    $region8: #{tpu_custom_call.1} parent=1 // pred_region
      %28 = vsyncadd [#allocation6], 0
      %s29 = sshll.u32 %s1, 4
      %s30 = int_to_ptr.hbm [resolvable:$true] %s29
      %s31 = sshll.u32 [#allocation5], 4
      %s32 = int_to_ptr.vmem [resolvable:$true] %s31
      %37 = dma.hbm_to_vmem [thread:$0]  %s30, 512, %s32, [#allocation6], 128, 128, 8
    $region9: #{tpu_custom_call.1} parent=1 // pred_fallthru
      _
    // Predicated region
    $region10: #{tpu_custom_call.1} parent=1 // pred_check
      _
    $region11: #{tpu_custom_call.1} parent=1 // pred_check_branch
      %39 = sbr.rel (0) target = $region13
    $region12: #{tpu_custom_call.1} parent=1 // pred_region
      %41 = vsyncadd [#allocation6], 0
      %s42 = sshll.u32 %s2, 4
      %s43 = int_to_ptr.hbm [resolvable:$true] %s42
      %s44 = sshll.u32 [#allocation7], 4
      %s45 = int_to_ptr.vmem [resolvable:$true] %s44
      %50 = dma.hbm_to_vmem [thread:$0]  %s43, 512, %s45, [#allocation6], 128, 128, 8
    $region13: #{tpu_custom_call.1} parent=1 // pred_fallthru
      _
    // Predicated region
    $region14: #{tpu_custom_call.1} parent=1 // pred_check
      _
    $region15: #{tpu_custom_call.1} parent=1 // pred_check_branch
      %52 = sbr.rel (0) target = $region17
    $region16: #{tpu_custom_call.1} parent=1 // pred_region
      _
    $region17: #{tpu_custom_call.1} parent=1 // pred_fallthru
      _
    // Predicated region
    $region18: #{tpu_custom_call.1} parent=1 // pred_check
      _
    $region19: #{tpu_custom_call.1} parent=1 // pred_check_branch
      %54 = sbr.rel (0) target = $region21
    $region20: #{tpu_custom_call.1} parent=1 // pred_region
      %56 = dma.done [#allocation3], 512
    $region21: #{tpu_custom_call.1} parent=1 // pred_fallthru
      _
    // Predicated region
    $region22: #{tpu_custom_call.1} parent=1 // pred_check
      _
    $region23: #{tpu_custom_call.1} parent=1 // pred_check_branch
      %58 = sbr.rel (0) target = $region25
    $region24: #{tpu_custom_call.1} parent=1 // pred_region
      %60 = dma.done [#allocation6], 512
    $region25: #{tpu_custom_call.1} parent=1 // pred_fallthru
      _
    // Predicated region
    $region26: #{tpu_custom_call.1} parent=1 // pred_check
      _
    $region27: #{tpu_custom_call.1} parent=1 // pred_check_branch
      %62 = sbr.rel (0) target = $region29
    $region28: #{tpu_custom_call.1} parent=1 // pred_region
      %64 = dma.done [#allocation6], 512
    $region29: #{tpu_custom_call.1} parent=1 // pred_fallthru
      _
    %v65 = vld [vmem:[#allocation2] sm:$0xff]
    %v66 = vld [vmem:[#allocation2 + $0x8] sm:$0xff]
    %v67 = vld [vmem:[#allocation2 + $0x10] sm:$0xff]
    %v68 = vld [vmem:[#allocation2 + $0x18] sm:$0xff]
    %v69 = vld [vmem:[#allocation5] sm:$0xff]
    %v70 = vld [vmem:[#allocation5 + $0x8] sm:$0xff]
    %v71 = vld [vmem:[#allocation5 + $0x10] sm:$0xff]
    %v72 = vld [vmem:[#allocation5 + $0x18] sm:$0xff]
    %vm73 = vcmask 261120
    %v75 = vsel %vm73, %v65, 0
    %v78 = vsel %vm73, %v66, 0
    %v81 = vsel %vm73, %v67, 0
    %v84 = vsel %vm73, %v68, 0
    %86 = vmatpush.msra.mxu0 0.0
    %87 = vmatpush.msra.mxu0 0.0
    %88 = vmatpush.msra.mxu0 0.0
    %89 = vmatpush.msra.mxu0 0.0
    %90 = vmatpush.msra.mxu0 0.0
    %91 = vmatpush.msra.mxu0 0.0
    %92 = vmatpush.msra.mxu0 0.0
    %93 = vmatpush.msra.mxu0 0.0
    %94 = vmatpush.msra.mxu0 0.0
    %95 = vmatpush.msra.mxu0 0.0
    %96 = vmatpush.msra.mxu0 0.0
    %97 = vmatpush.msra.mxu0 0.0
    %98 = vmatpush.msra.mxu0 %v72
    %99 = vmatpush.msra.mxu0 %v71
    %100 = vmatpush.msra.mxu0 %v70
    %101 = vmatpush.msra.mxu0 %v69
    %102 = vmatmul.f32.gmra.mxu0 %v75
    %v103 = vpop.f32.mrf.mxu0
    %v104 = vadd.f32 0.0, %v103
    %105 = vmatmul.f32.gmra.mxu0 %v78
    %v106 = vpop.f32.mrf.mxu0
    %v107 = vadd.f32 0.0, %v106
    %108 = vmatmul.f32.gmra.mxu0 %v81
    %v109 = vpop.f32.mrf.mxu0
    %v110 = vadd.f32 0.0, %v109
    %111 = vmatmul.f32.gmra.mxu0 %v84
    %v112 = vpop.f32.mrf.mxu0
    %v113 = vadd.f32 0.0, %v112
    %114 = vdwg.mxu0
    %v115 = vld [vmem:[#allocation7] sm:$0xff]
    %v116 = vld [vmem:[#allocation7 + $0x8] sm:$0xff]
    %v117 = vld [vmem:[#allocation7 + $0x10] sm:$0xff]
    %v118 = vld [vmem:[#allocation7 + $0x18] sm:$0xff]
    %119 = vmatpush.msra.mxu0 0.0
    %120 = vmatpush.msra.mxu0 0.0
    %121 = vmatpush.msra.mxu0 0.0
    %122 = vmatpush.msra.mxu0 0.0
    %123 = vmatpush.msra.mxu0 0.0
    %124 = vmatpush.msra.mxu0 0.0
    %125 = vmatpush.msra.mxu0 0.0
    %126 = vmatpush.msra.mxu0 0.0
    %127 = vmatpush.msra.mxu0 0.0
    %128 = vmatpush.msra.mxu0 0.0
    %129 = vmatpush.msra.mxu0 0.0
    %130 = vmatpush.msra.mxu0 0.0
    %131 = vmatpush.msra.mxu0 %v118
    %132 = vmatpush.msra.mxu0 %v117
    %133 = vmatpush.msra.mxu0 %v116
    %134 = vmatpush.msra.mxu0 %v115
    %135 = vmatmul.f32.gmra.mxu0 %v75
    %v136 = vpop.f32.mrf.mxu0
    %v137 = vadd.f32 0.0, %v136
    %138 = vmatmul.f32.gmra.mxu0 %v78
    %v139 = vpop.f32.mrf.mxu0
    %v140 = vadd.f32 0.0, %v139
    %141 = vmatmul.f32.gmra.mxu0 %v81
    %v142 = vpop.f32.mrf.mxu0
    %v143 = vadd.f32 0.0, %v142
    %144 = vmatmul.f32.gmra.mxu0 %v84
    %v145 = vpop.f32.mrf.mxu0
    %v146 = vadd.f32 0.0, %v145
    %147 = vdwg.mxu0
    %vm152 = vcmask 1046528
    %v153 = vrot.slane %v137, 1
    %v154 = vrot.slane %v140, 1
    %v155 = vsel %vm152, %v153, %v154
    %v156 = vrot.slane %v143, 1
    %v157 = vsel %vm152, %v154, %v156
    %v158 = vrot.slane %v146, 1
    %v159 = vsel %vm152, %v156, %v158
    %v164 = vadd.f32 %v104, %v155
    %v165 = vadd.f32 %v107, %v157
    %v166 = vadd.f32 %v110, %v159
    %v167 = vadd.f32 %v113, %v158
    %v168 = vsel %vm73, %v164, -inf
    %vm169 = vcmask 260096
    %v170 = vsel %vm169, %v165, -inf
    %v171 = vmax.f32 %v168, %v170
    %v172 = vrot.slane %v171, 4
    %v173 = vmax.f32 %v171, %v172
    %v174 = vrot.slane %v173, 2
    %v175 = vmax.f32 %v173, %v174
    %v176 = vrot.slane %v175, 1
    %v177 = vmax.f32 %v175, %v176
    %v178 = vsel %vm73, %v166, -inf
    %v179 = vsel %vm169, %v167, -inf
    %v180 = vmax.f32 %v178, %v179
    %v181 = vrot.slane %v180, 4
    %v182 = vmax.f32 %v180, %v181
    %v183 = vrot.slane %v182, 2
    %v184 = vmax.f32 %v182, %v183
    %v185 = vrot.slane %v184, 1
    %v186 = vmax.f32 %v184, %v185
    %vm187 = vcmask 1040384
    %v188 = vsel %vm187, %v177, %v186
    %v189 = vld [vmem:[%s3] sm:$0x1]
    %v191 = vperm.slane %v189, 0
    %v193 = vadd.f32 %v188, %v191
    %v194 = vmax.f32 %v193, 0.0
    %vm195 = vcmask 254976
    %196 = vst.msk [vmem:[#allocation8] sm:$0x3] %vm195, %v194
    // Predicated region
    $region30: #{tpu_custom_call.1} parent=1 // pred_check
      _
    $region31: #{tpu_custom_call.1} parent=1 // pred_check_branch
      %198 = sbr.rel (0) target = $region33
    $region32: #{tpu_custom_call.1} parent=1 // pred_region
      %200 = vsyncadd [#allocation4], 0
      %s202 = sshll.u32 [#allocation8], 4
      %s203 = int_to_ptr.vmem [resolvable:$true] %s202
      %s204 = sshll.u32 %s4, 4
      %s205 = int_to_ptr.hbm [resolvable:$true] %s204
      %207 = dma.vmem_to_hbm [thread:$0]  %s203, 32, %s205, [#allocation4]
    $region33: #{tpu_custom_call.1} parent=1 // pred_fallthru
      _
    // Predicated region
    $region34: #{tpu_custom_call.1} parent=1 // pred_check
      _
    $region35: #{tpu_custom_call.1} parent=1 // pred_check_branch
      %209 = sbr.rel (0) target = $region37
    $region36: #{tpu_custom_call.1} parent=1 // pred_region
      %211 = dma.done [#allocation4], 32
    $region37: #{tpu_custom_call.1} parent=1 // pred_fallthru
      _
    %212 = vsyncpa [#allocation3], 1
    %213 = vsyncpa [#allocation6], 1
    %214 = vsyncpa [#allocation4], 1

</llo_original>
